<compile_context>
chip_gen: v6e
topology: v6e:2x2x1
jax: 0.10.0
libtpu: 0.0.40
codegen_flags: <defaults>
</compile_context>

<pallas_src>
import jax
import jax.numpy as jnp
from jax import lax
from jax.experimental import pallas as pl
from jax.experimental.pallas import tpu as pltpu


def _round_up(x, m):
    return ((x + m - 1) // m) * m


def _tiles(nnodes, tm, tk):
    """Effective tile sizes + padded dims.

    tm: lane dim of the T^T tile / output (multiple of 128).
    tk: contraction dim = int8 sublane dim of the T^T tile (multiple of 32).
    """
    tm_eff = min(tm, _round_up(nnodes, 128))
    nm_pad = _round_up(nnodes, tm_eff)
    tk_eff = min(tk, _round_up(nnodes, 32))
    nk_pad = _round_up(nnodes, tk_eff)
    return tm_eff, tk_eff, nm_pad, nk_pad


# --------------------------- Pallas kernel ----------------------------------
def _tpath_kernel(pt_ref, tt_ref, o_ref):
    # pt_ref: (C, tk)   bf16 slab of (0.5 * I @ Emb)^T
    # tt_ref: (tk, tm)  int8 {0,1} tile of T^T  (dominant HBM stream)
    # o_ref : (C, tm)   f32 output block, resident across the K grid axis
    @pl.when(pl.program_id(1) == 0)
    def _():
        o_ref[...] = jnp.zeros_like(o_ref)

    t_bf = tt_ref[...].astype(jnp.bfloat16)        # {0,1} -> bf16, exact
    o_ref[...] += lax.dot_general(
        pt_ref[...], t_bf,
        dimension_numbers=(((1,), (0,)), ((), ())),
        preferred_element_type=jnp.float32)


# ------------------- path-matrix setup (gen_paths analogue) -----------------
def build_node_seq(nnodes, path_length):
    # Deterministic replacement for torch_cluster.random_walk: ring walk
    # node_seq[l, n] = (n + l) % nnodes, shape (path_length, nnodes).
    # TODO(synk): real random_walk(edge_index, ...) has no in-script
    # equivalent; any valid node_seq yields the same forward() algebra.
    l_idx = jnp.arange(path_length)[:, None]
    n_idx = jnp.arange(nnodes)[None, :]
    return (n_idx + l_idx) % nnodes


def _scatter_indices(nnodes, node_seq):
    # Matches the module:  T[batch_indices_i, batch_indices_j] += 0.5
    # (non-accumulating scatter: every visited entry holds 0.5).
    L = node_seq.shape[0]
    bi = jnp.repeat(jnp.arange(nnodes)[:, None], L, axis=1).flatten()  # T rows
    bj = node_seq.flatten()                                            # T cols
    return bi, bj


def build_path_matrix_transposed(nnodes, node_seq, *, tm=512, tk=4096):
    """T^T as int8 {0,1}, already padded to the kernel's tile grid.

    The 0.5 path weight is folded into P inside the forward; building T in
    the compact dtype/padded shape once per graph keeps the per-forward HBM
    traffic at exactly one read of T^T.
    """
    _, _, nm_pad, nk_pad = _tiles(nnodes, tm, tk)
    bi, bj = _scatter_indices(nnodes, node_seq)
    return jnp.zeros((nk_pad, nm_pad), jnp.int8).at[bj, bi].set(1)


def build_path_matrix_dense(nnodes, node_seq, dtype=jnp.float32):
    """Dense f32 T (reference / validation only)."""
    bi, bj = _scatter_indices(nnodes, node_seq)
    return jnp.zeros((nnodes, nnodes), dtype).at[bi, bj].set(0.5)


# ------------------------------ forward --------------------------------------
def graph_path_forward(Tt, I, Emb, *, tm=512, tk=4096):
    """Ic = T @ (I @ Emb), with T supplied as the padded int8 transpose Tt."""
    N, E = I.shape
    E2, C = Emb.shape
    assert E == E2
    tm_eff, tk_eff, nm_pad, nk_pad = _tiles(N, tm, tk)
    assert Tt.shape == (nk_pad, nm_pad) and Tt.dtype == jnp.int8

    # Skinny embed product: negligible FLOPs/bytes, leave it to XLA (fuses the
    # cast). Fold the 0.5 path weight here and emit the bf16 transposed slab
    # that the kernel streams against T^T.
    P = jnp.dot(I.astype(jnp.float32), Emb.astype(jnp.float32))       # (N, C)
    Pt = jnp.zeros((C, nk_pad), jnp.bfloat16).at[:, :N].set(
        (0.5 * P).T.astype(jnp.bfloat16))

    IcT = pl.pallas_call(
        _tpath_kernel,
        out_shape=jax.ShapeDtypeStruct((C, nm_pad), jnp.float32),
        grid_spec=pl.GridSpec(
            grid=(nm_pad // tm_eff, nk_pad // tk_eff),   # (row tiles, K) — K last
            in_specs=[
                pl.BlockSpec((C, tk_eff), lambda i, k: (0, k)),       # Pt slab
                pl.BlockSpec((tk_eff, tm_eff), lambda i, k: (k, i)),  # T^T tile
            ],
            out_specs=pl.BlockSpec((C, tm_eff), lambda i, k: (0, i)),
        ),
        compiler_params=pltpu.CompilerParams(
            dimension_semantics=("parallel", "arbitrary"),
            vmem_limit_bytes=32 << 20),
    )(Pt, Tt)

    return IcT[:, :N].T.astype(I.dtype)


# ------------------------- parameter initialization --------------------------
def xavier_uniform(key, embdsize, nin, dtype=jnp.float32):
    # torch.nn.init.xavier_uniform_ on an (embdsize, nin) matrix.
    bound = (6.0 / (embdsize + nin)) ** 0.5
    return jax.random.uniform(key, (embdsize, nin), dtype,
                              minval=-bound, maxval=bound)


# ------------------------------- main ----------------------------------------
if __name__ == "__main__":
    nnodes = 16
    embdsize = 32
    nin = 4
    path_length = 3

    key = jax.random.PRNGKey(0)
    k_emb, k_inp = jax.random.split(key)

    Emb = xavier_uniform(k_emb, embdsize, nin)               # (embdsize, nin)
    I = jax.random.normal(k_inp, (nnodes, embdsize), jnp.float32)

    node_seq = build_node_seq(nnodes, path_length)           # gen_paths analogue
    Tt = build_path_matrix_transposed(nnodes, node_seq)      # int8 T^T, padded

    Ic = graph_path_forward(Tt, I, Emb)
    Ic = jax.block_until_ready(Ic)
    assert Ic.shape == (nnodes, nin)

    # Full f32 reference (kernel rounds 0.5*P to bf16 -> ~1e-3 relative error).
    T = build_path_matrix_dense(nnodes, node_seq)
    P = I @ Emb
    ref = T @ P
    assert jnp.allclose(Ic, ref, atol=2e-2, rtol=2e-2)

    # Tight check against a reference computed at the kernel's internal precision.
    Pq = (0.5 * P).astype(jnp.bfloat16).astype(jnp.float32)
    ref_tight = (T > 0).astype(jnp.float32) @ Pq
    assert jnp.allclose(Ic, ref_tight, atol=1e-4, rtol=1e-4)

    print("KERNEL_OK")
</pallas_src>

<mosaic_0001>
module attributes {stable_mosaic.version = 11 : i64} {
  func.func @_tpath_kernel(%arg0: i32, %arg1: i32, %arg2: memref<4x32xbf16, #tpu.memory_space<vmem>>, %arg3: memref<32x128xi8, #tpu.memory_space<vmem>>, %arg4: memref<4x128xf32, #tpu.memory_space<vmem>>) attributes {dimension_semantics = [#tpu.dimension_semantics<parallel>, #tpu.dimension_semantics<arbitrary>], iteration_bounds = array<i64: 1, 1>, scalar_prefetch = 0 : i64, scratch_operands = 0 : i64, tpu.core_type = #tpu.core_type<tc>, window_params = [{transform_indices = @transform_0, window_bounds = array<i64: 4, 32>}, {transform_indices = @transform_1, window_bounds = array<i64: 32, 128>}, {transform_indices = @transform_2, window_bounds = array<i64: 4, 128>}]} {
    %c0_i32 = arith.constant 0 : i32
    %0 = arith.cmpi eq, %arg1, %c0_i32 : i32
    %1 = arith.extui %0 : i1 to i32
    %c0_i32_0 = arith.constant 0 : i32
    %2 = arith.cmpi ne, %1, %c0_i32_0 : i32
    scf.if %2 {
      %cst_8 = arith.constant 0.000000e+00 : f32
      %10 = vector.broadcast %cst_8 : f32 to vector<4x128xf32>
      %c0_9 = arith.constant 0 : index
      %c0_10 = arith.constant 0 : index
      %11 = vector.load %arg4[%c0_9, %c0_10] : memref<4x128xf32, #tpu.memory_space<vmem>>, vector<4x128xf32>
      tpu.vector_store %arg4[%c0_9, %c0_10], %10 {strides = array<i32>} : memref<4x128xf32, #tpu.memory_space<vmem>>, vector<4x128xf32>,
    } else {
    }
    %c0 = arith.constant 0 : index
    %c0_1 = arith.constant 0 : index
    %3 = vector.load %arg3[%c0, %c0_1] : memref<32x128xi8, #tpu.memory_space<vmem>>, vector<32x128xi8>
    %4 = arith.sitofp %3 : vector<32x128xi8> to vector<32x128xbf16>
    %c0_2 = arith.constant 0 : index
    %c0_3 = arith.constant 0 : index
    %5 = vector.load %arg4[%c0_2, %c0_3] : memref<4x128xf32, #tpu.memory_space<vmem>>, vector<4x128xf32>
    %c0_4 = arith.constant 0 : index
    %c0_5 = arith.constant 0 : index
    %6 = vector.load %arg2[%c0_4, %c0_5] : memref<4x32xbf16, #tpu.memory_space<vmem>>, vector<4x32xbf16>
    %cst = arith.constant dense<0.000000e+00> : vector<4x128xf32>
    %7 = tpu.matmul %6, %4, %cst {dimension_numbers = #tpu.dot_dimension_numbers<[1], [0], [0], [1], [0, 0, 1, 1], [], []>} : vector<4x32xbf16>, vector<32x128xbf16>, vector<4x128xf32> -> vector<4x128xf32>
    %8 = arith.addf %5, %7 : vector<4x128xf32>
    %c0_6 = arith.constant 0 : index
    %c0_7 = arith.constant 0 : index
    %9 = vector.load %arg4[%c0_6, %c0_7] : memref<4x128xf32, #tpu.memory_space<vmem>>, vector<4x128xf32>
    tpu.vector_store %arg4[%c0_6, %c0_7], %8 {strides = array<i32>} : memref<4x128xf32, #tpu.memory_space<vmem>>, vector<4x128xf32>,
    return
  }
  func.func @transform_0(%arg0: i32, %arg1: i32) -> (i32, i32) {
    %c0_i32 = arith.constant 0 : i32
    %c0_i32_0 = arith.constant 0 : i32
    return %c0_i32, %arg1 : i32, i32
  }
  func.func @transform_1(%arg0: i32, %arg1: i32) -> (i32, i32) {
    %c0_i32 = arith.constant 0 : i32
    return %arg1, %arg0 : i32, i32
  }
  func.func @transform_2(%arg0: i32, %arg1: i32) -> (i32, i32) {
    %c0_i32 = arith.constant 0 : i32
    %c0_i32_0 = arith.constant 0 : i32
    return %c0_i32, %arg0 : i32, i32
  }
}

</mosaic_0001>

<llo_original>
// kernel: tpu_custom_call.1
$region0: #{tpu_custom_call.1}
  #allocation0 [shape = 'u32[]', space=smem, size = 0x4, offset = 0x4, fixed_abs, tag = 'smem constant byte address 0x4 - core index']
  #allocation1 [shape = 'u32[144,128]{1,0:T(1,128)}', space=vmem, size = 0x12000, scoped, tag = 'internal scratch']
  %s0 = inlined_call_operand.hbm [shape: bf16[4,32], index: 0, kind: input, shape index: {}]
  %s1 = inlined_call_operand.hbm [shape: s8[32,128], index: 1, kind: input, shape index: {}]
  %s2 = inlined_call_operand.hbm [shape: f32[4,128], index: 2, kind: output, shape index: {}]
  %s3 = sld [smem:[#allocation0]]
  $region30: #{tpu_custom_call.1} parent=0
    _
  %s5 = ssub.s32 1, %s3
  %s6 = scalar_select 0, %s5, %s3
  $region1: #{tpu_custom_call.1} parent=0
    #allocation2 [shape = 'u8[1024]{0}', space=vmem, size = 0x400, scoped, tag = 'input window, operand 0, single buffered']
    #allocation3 [shape = 's32[1]{0}', space=sflag, size = 0x4, scoped, tag = 'scoped memory for tpu_custom_call.1']
    #allocation4 [shape = 's32[1]{0}', space=sflag, size = 0x4, scoped, tag = 'scoped memory for tpu_custom_call.1']
    #allocation5 [shape = 'u8[4096]{0}', space=vmem, size = 0x1000, scoped, tag = 'input window, operand 1, single buffered']
    #allocation6 [shape = 's32[1]{0}', space=sflag, size = 0x4, scoped, tag = 'scoped memory for tpu_custom_call.1']
    #allocation7 [shape = 'u8[2048]{0}', space=vmem, size = 0x800, scoped, tag = 'output window, operand 0, single buffered']
    %7 = vsyncpa [#allocation3], 0
    %8 = vsyncpa [#allocation6], 0
    %9 = vsyncpa [#allocation4], 0
    // Predicated region
    $region2: #{tpu_custom_call.1} parent=1 // pred_check
      _
    $region3: #{tpu_custom_call.1} parent=1 // pred_check_branch
      %11 = sbr.rel (0) target = $region5
    $region4: #{tpu_custom_call.1} parent=1 // pred_region
      %s13 = ssub.s32 32, 32
      %14 = vsyncadd [#allocation3], %s13
      %s16 = sshll.u32 [#allocation2], 4
      %s17 = int_to_ptr.vmem [resolvable:$true] %s16
      %19 = dma.hbm_to_vmem [thread:$0]  %s0, 32, %s17, [#allocation3]
    $region5: #{tpu_custom_call.1} parent=1 // pred_fallthru
      _
    // Predicated region
    $region6: #{tpu_custom_call.1} parent=1 // pred_check
      _
    $region7: #{tpu_custom_call.1} parent=1 // pred_check_branch
      %21 = sbr.rel (0) target = $region9
    $region8: #{tpu_custom_call.1} parent=1 // pred_region
      %s23 = ssub.s32 128, 128
      %24 = vsyncadd [#allocation6], %s23
      %s26 = sshll.u32 [#allocation5], 4
      %s27 = int_to_ptr.vmem [resolvable:$true] %s26
      %29 = dma.hbm_to_vmem [thread:$0]  %s1, 128, %s27, [#allocation6]
    $region9: #{tpu_custom_call.1} parent=1 // pred_fallthru
      _
    // Predicated region
    $region10: #{tpu_custom_call.1} parent=1 // pred_check
      _
    $region11: #{tpu_custom_call.1} parent=1 // pred_check_branch
      %31 = sbr.rel (0) target = $region13
    $region12: #{tpu_custom_call.1} parent=1 // pred_region
      %32 = dma.done [#allocation3], 32
    $region13: #{tpu_custom_call.1} parent=1 // pred_fallthru
      _
    // Predicated region
    $region14: #{tpu_custom_call.1} parent=1 // pred_check
      _
    $region15: #{tpu_custom_call.1} parent=1 // pred_check_branch
      %34 = sbr.rel (0) target = $region17
    $region16: #{tpu_custom_call.1} parent=1 // pred_region
      %35 = dma.done [#allocation6], 128
    $region17: #{tpu_custom_call.1} parent=1 // pred_fallthru
      _
    %p37 = scmp.eq.s32.totalorder 0, 0
    // Predicated region
    $region18: #{tpu_custom_call.1} parent=1 // pred_check
      %p38 = pneg %p37
    $region19: #{tpu_custom_call.1} parent=1 // pred_check_branch
      %40 = sbr.rel (%p38) target = $region21
    $region20: #{tpu_custom_call.1} parent=1 // pred_region
      %41 = vst [vmem:[#allocation7] sm:$0xf] 0.0
    $region21: #{tpu_custom_call.1} parent=1 // pred_fallthru
      _
    %v42 = vld [vmem:[#allocation5] sm:$0xff]
    %v43 = vunpack.c.l.s8.bf16 %v42
    %v44 = vunpack.c.h.s8.bf16 %v42
    %v45 = vld [vmem:[#allocation7] sm:$0xf]
    %v46 = vld [vmem:[#allocation2] sm:$0x3]
    %vm47 = vcmask 261120
    %v49 = vsel %vm47, %v46, 0
    %51 = vmatprep.subr.bf16.mxu0 0
    %52 = vmatpush1.bf16.msra.mxu0 0
    %53 = vmatprep.subr.bf16.mxu0 0
    %54 = vmatpush1.bf16.msra.mxu0 0
    %55 = vmatprep.subr.bf16.mxu0 0
    %56 = vmatpush1.bf16.msra.mxu0 0
    %57 = vmatprep.subr.bf16.mxu0 0
    %58 = vmatpush1.bf16.msra.mxu0 0
    %59 = vmatprep.subr.bf16.mxu0 0
    %60 = vmatpush1.bf16.msra.mxu0 0
    %61 = vmatprep.subr.bf16.mxu0 0
    %62 = vmatpush1.bf16.msra.mxu0 0
    %63 = vmatprep.subr.bf16.mxu0 0
    %64 = vmatpush1.bf16.msra.mxu0 %v44
    %65 = vmatprep.subr.bf16.mxu0 0
    %66 = vmatpush1.bf16.msra.mxu0 %v43
    %67 = vmatprep.subr.bf16.mxu0 0
    %68 = vmatpush2.bf16.msra.mxu0 0
    %69 = vmatprep.subr.bf16.mxu0 0
    %70 = vmatpush2.bf16.msra.mxu0 0
    %71 = vmatprep.subr.bf16.mxu0 0
    %72 = vmatpush2.bf16.msra.mxu0 0
    %73 = vmatprep.subr.bf16.mxu0 0
    %74 = vmatpush2.bf16.msra.mxu0 0
    %75 = vmatprep.subr.bf16.mxu0 0
    %76 = vmatpush2.bf16.msra.mxu0 0
    %77 = vmatprep.subr.bf16.mxu0 0
    %78 = vmatpush2.bf16.msra.mxu0 0
    %79 = vmatprep.subr.bf16.mxu0 0
    %80 = vmatpush2.bf16.msra.mxu0 0
    %81 = vmatprep.subr.bf16.mxu0 0
    %82 = vmatpush2.bf16.msra.mxu0 0
    %83 = vmatprep.mubr.bf16.mxu0 0
    %84 = vmatmul.mubr.bf16.gmra.mxu0 %v49
    %v85 = vpop.f32.mrf.mxu0
    %v86 = vadd.f32 0.0, %v85
    %v87 = vpop.f32.mrf.mxu0
    %v88 = vpop.f32.mrf.mxu0
    %v89 = vpop.f32.mrf.mxu0
    %90 = vdwg.mxu0
    %v91 = vadd.f32 %v45, %v86
    %92 = vst [vmem:[#allocation7] sm:$0xf] %v91
    // Predicated region
    $region22: #{tpu_custom_call.1} parent=1 // pred_check
      _
    $region23: #{tpu_custom_call.1} parent=1 // pred_check_branch
      %94 = sbr.rel (0) target = $region25
    $region24: #{tpu_custom_call.1} parent=1 // pred_region
      %s96 = ssub.s32 64, 64
      %97 = vsyncadd [#allocation4], %s96
      %s99 = sshll.u32 [#allocation7], 4
      %s100 = int_to_ptr.vmem [resolvable:$true] %s99
      %102 = dma.vmem_to_hbm [thread:$0]  %s100, 64, %s2, [#allocation4]
    $region25: #{tpu_custom_call.1} parent=1 // pred_fallthru
      _
    // Predicated region
    $region26: #{tpu_custom_call.1} parent=1 // pred_check
      _
    $region27: #{tpu_custom_call.1} parent=1 // pred_check_branch
      %104 = sbr.rel (0) target = $region29
    $region28: #{tpu_custom_call.1} parent=1 // pred_region
      %105 = dma.done [#allocation4], 64
    $region29: #{tpu_custom_call.1} parent=1 // pred_fallthru
      _
    %106 = vsyncpa [#allocation3], 1
    %107 = vsyncpa [#allocation6], 1
    %108 = vsyncpa [#allocation4], 1

</llo_original>
